<compile_context>
chip_gen: v6e
topology: v6e:2x2x1
jax: 0.10.0
libtpu: 0.0.40
codegen_flags: <defaults>
</compile_context>

<pallas_src>
import math
from functools import partial

import jax
import jax.numpy as jnp
from jax import lax
from jax.experimental import pallas as pl
from jax.experimental.pallas import tpu as pltpu

EPS = 1e-5  # PyTorch nn.LayerNorm default


def _pick_tile(dim, target, align):
    """Largest tile <= target that divides dim and is a multiple of align
    (or the full dim if no such tile exists / dim already small)."""
    if dim <= target:
        return dim
    t = (target // align) * align
    while t >= align:
        if dim % t == 0:
            return t
        t -= align
    return dim


def _pick_ff_chunk(ff, target=1024):
    """FF-hidden chunk size: multiple of 128 that divides 4C (or full 4C)."""
    if ff <= target:
        return ff
    for c in range(target, 127, -128):
        if ff % c == 0:
            return c
    return ff


def _vmem_capacity_bytes():
    try:
        info = pltpu.get_tpu_info()
        return int(getattr(info, "vmem_capacity_bytes", 64 * 1024 * 1024))
    except Exception:
        return 64 * 1024 * 1024  # conservative (v7x per-core)


def _transformer_vmem_bytes(B, L, C, ffc):
    bf, f4 = 2, 4
    # per-(layer, ff-chunk) weight blocks, double-buffered for prefetch
    w_blocks = (C * 3 * C + C * C + 2 * C * ffc) * bf + (9 * C + ffc) * f4
    weights = 2 * w_blocks
    # resident activations: in block, out block, residual(f32)+LN2(bf16)+heads
    acts = (B * L * C) * (2 * bf + 2 * bf + f4 + bf) + L * C * bf
    # transient intermediates inside one grid step (qkv, scores, attn, h1)
    trans = L * 3 * C * (f4 + bf) + 2 * L * L * f4 + L * C * f4 + L * ffc * f4
    return weights + acts + trans


def _vmem_limit_bytes(est):
    cap = _vmem_capacity_bytes()
    return int(min(max(int(est * 1.4), 32 * 1024 * 1024), int(0.75 * cap)))


# --------------------------------------------------------------------------
# Tiled matmul kernel (patch embedding). bf16 operands, f32 accumulation.
# --------------------------------------------------------------------------
def _matmul_kernel(a_ref, b_ref, o_ref):
    o_ref[...] = jnp.dot(a_ref[...], b_ref[...],
                         preferred_element_type=jnp.float32).astype(o_ref.dtype)


def pallas_matmul(a, b, out_dtype=jnp.float32):
    M, K = a.shape
    K2, N = b.shape
    assert K == K2
    a = a.astype(jnp.bfloat16)
    b = b.astype(jnp.bfloat16)
    tm = _pick_tile(M, 256, 8)
    tn = _pick_tile(N, 512, 128)
    grid = (M // tm, N // tn)
    return pl.pallas_call(
        _matmul_kernel,
        out_shape=jax.ShapeDtypeStruct((M, N), out_dtype),
        grid=grid,
        in_specs=[pl.BlockSpec((tm, K), lambda i, j: (i, 0)),
                  pl.BlockSpec((K, tn), lambda i, j: (0, j))],
        out_specs=pl.BlockSpec((tm, tn), lambda i, j: (i, j)),
        compiler_params=pltpu.CompilerParams(
            dimension_semantics=("parallel", "parallel")),
    )(a, b)


# --------------------------------------------------------------------------
# Fused positional-embedding add + ln_pre. Grid over batch, emits bf16.
# --------------------------------------------------------------------------
def _posln_kernel(x_ref, pos_ref, w_ref, b_ref, o_ref):
    x = x_ref[0].astype(jnp.float32) + pos_ref[...].astype(jnp.float32)
    mu = jnp.mean(x, axis=-1, keepdims=True)
    var = jnp.mean((x - mu) ** 2, axis=-1, keepdims=True)
    xn = (x - mu) * lax.rsqrt(var + EPS) * w_ref[...] + b_ref[...]
    o_ref[0] = xn.astype(o_ref.dtype)


def pallas_posembed_ln(x, pos, w, b, out_dtype=jnp.bfloat16):
    B, L, C = x.shape
    return pl.pallas_call(
        _posln_kernel,
        out_shape=jax.ShapeDtypeStruct((B, L, C), out_dtype),
        grid=(B,),
        in_specs=[pl.BlockSpec((1, L, C), lambda bi: (bi, 0, 0)),
                  pl.BlockSpec((L, C), lambda bi: (0, 0)),
                  pl.BlockSpec((1, C), lambda bi: (0, 0)),
                  pl.BlockSpec((1, C), lambda bi: (0, 0))],
        out_specs=pl.BlockSpec((1, L, C), lambda bi: (bi, 0, 0)),
        compiler_params=pltpu.CompilerParams(
            dimension_semantics=("parallel",)),
    )(x, pos, w.reshape(1, C), b.reshape(1, C))


# --------------------------------------------------------------------------
# Fused ln_post + output projection on the CLS token.
# --------------------------------------------------------------------------
def _head_kernel(x_ref, w_ref, b_ref, proj_ref, cls_ref, logits_ref):
    x = x_ref[...].astype(jnp.float32)
    mu = jnp.mean(x, axis=-1, keepdims=True)
    var = jnp.mean((x - mu) ** 2, axis=-1, keepdims=True)
    xn = (x - mu) * lax.rsqrt(var + EPS) * w_ref[...] + b_ref[...]
    logits_ref[...] = xn
    cls_ref[...] = jnp.dot(xn.astype(jnp.bfloat16), proj_ref[...],
                           preferred_element_type=jnp.float32)


def pallas_head(x_cls, w, b, proj):
    B, C = x_cls.shape
    Dout = proj.shape[1]
    return pl.pallas_call(
        _head_kernel,
        out_shape=(jax.ShapeDtypeStruct((B, Dout), jnp.float32),
                   jax.ShapeDtypeStruct((B, C), jnp.float32)),
        grid=(1,),
        in_specs=[pl.BlockSpec((B, C), lambda i: (0, 0)),
                  pl.BlockSpec((1, C), lambda i: (0, 0)),
                  pl.BlockSpec((1, C), lambda i: (0, 0)),
                  pl.BlockSpec((C, Dout), lambda i: (0, 0))],
        out_specs=(pl.BlockSpec((B, Dout), lambda i: (0, 0)),
                   pl.BlockSpec((B, C), lambda i: (0, 0))),
    )(x_cls, w.reshape(1, C), b.reshape(1, C), proj.astype(jnp.bfloat16))


# --------------------------------------------------------------------------
# Whole transformer stack in ONE pallas_call.
#   grid = (layers, n_ff_chunks), both 'arbitrary' (sequential dependencies).
#   Per grid step (l, f):
#     f == 0 : attention branch of layer l (+ LN2, caches LN2(x) for the MLP)
#     all f  : one FF-hidden chunk of layer l's MLP, accumulated into the
#              residual scratch (wfc/wpr streamed chunk-by-chunk from HBM).
#   Residual stream lives in f32 VMEM scratch; HBM touched once in / once out.
# --------------------------------------------------------------------------
def _transformer_kernel(x_ref, ln1w, ln1b, wqkv, bqkv, wo, bo,
                        ln2w, ln2b, wfc, bfc, wpr, bpr,
                        o_ref, res_ref, xn2_ref, heads_ref,
                        *, n_head, n_layers, n_ff, batch):
    f32, bf16 = jnp.float32, jnp.bfloat16
    l_idx = pl.program_id(0)
    f_idx = pl.program_id(1)
    L = x_ref.shape[1]
    C = x_ref.shape[2]
    D = C // n_head
    scale = 1.0 / math.sqrt(D)

    def layer_norm(v, w, b):
        mu = jnp.mean(v, axis=-1, keepdims=True)
        var = jnp.mean((v - mu) ** 2, axis=-1, keepdims=True)
        return (v - mu) * lax.rsqrt(var + EPS) * w + b

    # Load the input activations from HBM exactly once (layer 0, chunk 0).
    @pl.when(jnp.logical_and(l_idx == 0, f_idx == 0))
    def _():
        res_ref[...] = x_ref[...].astype(f32)

    # ---- attention branch + LN2 (once per layer, at the first FF chunk) ----
    @pl.when(f_idx == 0)
    def _():
        w_qkv = wqkv[0]                    # (C, 3C) bf16
        w_o = wo[0]                        # (C, C)  bf16
        # TODO(synk): for large batch, split the batch across a 'parallel'
        # leading grid axis (v7x megacore) instead of this in-kernel loop;
        # at small B that would only double the per-core weight DMA.
        for b in range(batch):
            x = res_ref[b]                 # (L, C) f32
            xn = layer_norm(x, ln1w[0], ln1b[0])
            qkv = (jnp.dot(xn.astype(bf16), w_qkv,
                           preferred_element_type=f32) + bqkv[0])
            qkv = qkv.astype(bf16)         # single bf16 cast of the qkv buffer
            # TODO(synk): a lax.fori_loop over heads would bound live ranges
            # further, but needs dynamic lane-offset slicing (D < 128); static
            # slices + per-head scratch stores keep lowering robust.
            for h in range(n_head):
                qh = qkv[:, 0 * C + h * D:0 * C + (h + 1) * D]
                kh = qkv[:, 1 * C + h * D:1 * C + (h + 1) * D]
                vh = qkv[:, 2 * C + h * D:2 * C + (h + 1) * D]
                s = lax.dot_general(qh, kh, (((1,), (1,)), ((), ())),
                                    preferred_element_type=f32) * scale
                s = s - jnp.max(s, axis=-1, keepdims=True)
                p = jnp.exp(s)
                p = p * pl.reciprocal(jnp.sum(p, axis=-1, keepdims=True),
                                      approx=True)
                oh = jnp.dot(p.astype(bf16), vh, preferred_element_type=f32)
                heads_ref[:, h * D:(h + 1) * D] = oh.astype(bf16)   # head-major
            # one wide K=C out-projection (full MXU fill, no per-head adds)
            attn = jnp.dot(heads_ref[...], w_o,
                           preferred_element_type=f32) + bo[0]
            x_mid = x + attn
            xn2 = layer_norm(x_mid, ln2w[0], ln2b[0])
            xn2_ref[b] = xn2.astype(bf16)
            # pre-add c_proj bias; the FF chunks accumulate on top of this
            res_ref[b] = x_mid + bpr[0]

    # ---- one FF-hidden chunk of the MLP (every grid step) ----
    w_fc = wfc[0]                          # (C, ffc)  bf16
    w_pr = wpr[0]                          # (ffc, C)  bf16
    for b in range(batch):
        h1 = jnp.dot(xn2_ref[b], w_fc, preferred_element_type=f32) + bfc[0]
        h1 = h1 * pl.reciprocal(1.0 + jnp.exp(-1.702 * h1), approx=True)  # QuickGELU
        res_ref[b] = res_ref[b] + jnp.dot(h1.astype(bf16), w_pr,
                                          preferred_element_type=f32)

    # Write the final activations back to HBM exactly once.
    @pl.when(jnp.logical_and(l_idx == n_layers - 1, f_idx == n_ff - 1))
    def _():
        o_ref[...] = res_ref[...].astype(o_ref.dtype)


def _stack_blocks(blocks, width):
    Ly = len(blocks)
    C = width
    bf16 = jnp.bfloat16

    def st(key):
        return jnp.stack([b[key] for b in blocks], axis=0)

    return dict(
        ln1w=st('ln1_w').reshape(Ly, 1, C),
        ln1b=st('ln1_b').reshape(Ly, 1, C),
        wqkv=st('wqkv').astype(bf16),                    # (Ly, C, 3C)
        bqkv=st('bqkv').reshape(Ly, 1, 3 * C),
        wo=st('wo').astype(bf16),                        # (Ly, C, C)
        bo=st('bo').reshape(Ly, 1, C),
        ln2w=st('ln2_w').reshape(Ly, 1, C),
        ln2b=st('ln2_b').reshape(Ly, 1, C),
        wfc=st('wfc').astype(bf16),                      # (Ly, C, 4C)
        bfc=st('bfc').reshape(Ly, 1, 4 * C),
        wpr=st('wpr').astype(bf16),                      # (Ly, 4C, C)
        bpr=st('bpr').reshape(Ly, 1, C),
    )


def pallas_transformer(x, blocks, n_head):
    B, L, C = x.shape
    Ly = len(blocks)
    FF = 4 * C
    ffc = _pick_ff_chunk(FF)
    n_ff = FF // ffc
    w = _stack_blocks(blocks, C)

    est = _transformer_vmem_bytes(B, L, C, ffc)
    vlim = _vmem_limit_bytes(est)

    in_specs = [
        pl.BlockSpec((B, L, C), lambda l, f: (0, 0, 0)),          # x (resident)
        pl.BlockSpec((1, 1, C), lambda l, f: (l, 0, 0)),          # ln1_w
        pl.BlockSpec((1, 1, C), lambda l, f: (l, 0, 0)),          # ln1_b
        pl.BlockSpec((1, C, 3 * C), lambda l, f: (l, 0, 0)),      # wqkv
        pl.BlockSpec((1, 1, 3 * C), lambda l, f: (l, 0, 0)),      # bqkv
        pl.BlockSpec((1, C, C), lambda l, f: (l, 0, 0)),          # wo
        pl.BlockSpec((1, 1, C), lambda l, f: (l, 0, 0)),          # bo
        pl.BlockSpec((1, 1, C), lambda l, f: (l, 0, 0)),          # ln2_w
        pl.BlockSpec((1, 1, C), lambda l, f: (l, 0, 0)),          # ln2_b
        pl.BlockSpec((1, C, ffc), lambda l, f: (l, 0, f)),        # wfc chunk
        pl.BlockSpec((1, 1, ffc), lambda l, f: (l, 0, f)),        # bfc chunk
        pl.BlockSpec((1, ffc, C), lambda l, f: (l, f, 0)),        # wpr chunk
        pl.BlockSpec((1, 1, C), lambda l, f: (l, 0, 0)),          # bpr
    ]

    return pl.pallas_call(
        partial(_transformer_kernel, n_head=n_head, n_layers=Ly,
                n_ff=n_ff, batch=B),
        out_shape=jax.ShapeDtypeStruct((B, L, C), jnp.bfloat16),
        grid=(Ly, n_ff),
        in_specs=in_specs,
        out_specs=pl.BlockSpec((B, L, C), lambda l, f: (0, 0, 0)),
        scratch_shapes=[
            pltpu.VMEM((B, L, C), jnp.float32),    # residual stream
            pltpu.VMEM((B, L, C), jnp.bfloat16),   # cached LN2(x) for MLP chunks
            pltpu.VMEM((L, C), jnp.bfloat16),      # head-major attention concat
        ],
        compiler_params=pltpu.CompilerParams(
            dimension_semantics=("arbitrary", "arbitrary"),
            vmem_limit_bytes=vlim),
    )(x, w['ln1w'], w['ln1b'], w['wqkv'], w['bqkv'], w['wo'], w['bo'],
      w['ln2w'], w['ln2b'], w['wfc'], w['bfc'], w['wpr'], w['bpr'])


# --------------------------------------------------------------------------
# Full VisionTransformer forward.
# --------------------------------------------------------------------------
def vision_transformer_forward(x_nchw, params, *, patch_size, heads):
    B, Cin, H, W = x_nchw.shape
    P = patch_size
    gh, gw = H // P, W // P
    N = gh * gw
    width = params['class_embedding'].shape[0]

    # -- conv1 (Conv2d, kernel=stride=P, no bias) == patchify + matmul --
    patches = x_nchw.reshape(B, Cin, gh, P, gw, P)
    patches = patches.transpose(0, 2, 4, 1, 3, 5).reshape(B * N, Cin * P * P)
    w_conv = params['conv1_w'].reshape(width, Cin * P * P).T     # (Cin*P*P, width)
    x = pallas_matmul(patches, w_conv,
                      out_dtype=jnp.bfloat16).reshape(B, N, width)

    # -- class token concat (glue) + fused pos-embed + ln_pre kernel --
    cls = jnp.broadcast_to(params['class_embedding'], (B, 1, width)).astype(x.dtype)
    x = jnp.concatenate([cls, x], axis=1)                        # (B, N+1, width)
    x = pallas_posembed_ln(x, params['positional_embedding'],
                           params['ln_pre_w'], params['ln_pre_b'])  # bf16

    # -- whole transformer stack: one pallas_call, layer axis on the grid --
    x = pallas_transformer(x, params['blocks'], heads)           # bf16

    # -- fused ln_post + output projection on the CLS token --
    cls_x, x_logits = pallas_head(x[:, 0, :], params['ln_post_w'],
                                  params['ln_post_b'], params['proj'])
    tokens = x[:, 1:, :].astype(jnp.float32)
    # TODO(synk): 'others' side-channel (mid_feat hooks) has no kernel equivalent.
    return cls_x, x_logits, tokens


# --------------------------------------------------------------------------
# Deterministic parameter initialization (shapes from the module __init__).
# --------------------------------------------------------------------------
def init_params(key, *, input_resolution, patch_size, width, layers, heads,
                output_dim):
    del heads
    N = (input_resolution // patch_size) ** 2
    scale = width ** (-0.5)
    keys = jax.random.split(key, 4 + layers)
    params = {
        'conv1_w': 0.02 * jax.random.normal(
            keys[0], (width, 3, patch_size, patch_size), jnp.float32),
        'class_embedding': scale * jax.random.normal(
            keys[1], (width,), jnp.float32),
        'positional_embedding': scale * jax.random.normal(
            keys[2], (N + 1, width), jnp.float32),
        'ln_pre_w': jnp.ones((width,), jnp.float32),
        'ln_pre_b': jnp.zeros((width,), jnp.float32),
        'ln_post_w': jnp.ones((width,), jnp.float32),
        'ln_post_b': jnp.zeros((width,), jnp.float32),
        'proj': scale * jax.random.normal(
            keys[3], (width, output_dim), jnp.float32),
        'blocks': [],
    }
    for i in range(layers):
        bk = jax.random.split(keys[4 + i], 4)
        params['blocks'].append({
            'ln1_w': jnp.ones((width,), jnp.float32),
            'ln1_b': jnp.zeros((width,), jnp.float32),
            'wqkv': 0.02 * jax.random.normal(bk[0], (width, 3 * width),
                                             jnp.float32),
            'bqkv': jnp.zeros((3 * width,), jnp.float32),
            'wo': 0.02 * jax.random.normal(bk[1], (width, width), jnp.float32),
            'bo': jnp.zeros((width,), jnp.float32),
            'ln2_w': jnp.ones((width,), jnp.float32),
            'ln2_b': jnp.zeros((width,), jnp.float32),
            'wfc': 0.02 * jax.random.normal(bk[2], (width, 4 * width),
                                            jnp.float32),
            'bfc': jnp.zeros((4 * width,), jnp.float32),
            'wpr': 0.02 * jax.random.normal(bk[3], (4 * width, width),
                                            jnp.float32),
            'bpr': jnp.zeros((width,), jnp.float32),
        })
    return params


if __name__ == "__main__":
    input_resolution = 16
    patch_size = 8
    width = 32
    layers = 2
    heads = 4
    output_dim = 16
    batch = 2  # num_frames=1 -> bt == batch

    key = jax.random.PRNGKey(0)
    k_params, k_x = jax.random.split(key)
    params = init_params(k_params, input_resolution=input_resolution,
                         patch_size=patch_size, width=width, layers=layers,
                         heads=heads, output_dim=output_dim)
    x = jax.random.normal(
        k_x, (batch, 3, input_resolution, input_resolution), jnp.float32)

    cls_x, x_logits, tokens = vision_transformer_forward(
        x, params, patch_size=patch_size, heads=heads)
    jax.block_until_ready((cls_x, x_logits, tokens))

    assert cls_x.shape == (batch, output_dim)
    assert x_logits.shape == (batch, width)
    assert tokens.shape == (batch, (input_resolution // patch_size) ** 2, width)
    assert jnp.all(jnp.isfinite(cls_x)) and jnp.all(jnp.isfinite(x_logits))
    print("KERNEL_OK")
</pallas_src>

<mosaic_0001>
module attributes {stable_mosaic.version = 11 : i64} {
  func.func @_matmul_kernel(%arg0: i32, %arg1: i32, %arg2: memref<8x192xbf16, #tpu.memory_space<vmem>>, %arg3: memref<192x32xbf16, #tpu.memory_space<vmem>>, %arg4: memref<8x32xbf16, #tpu.memory_space<vmem>>) attributes {dimension_semantics = [#tpu.dimension_semantics<parallel>, #tpu.dimension_semantics<parallel>], iteration_bounds = array<i64: 1, 1>, scalar_prefetch = 0 : i64, scratch_operands = 0 : i64, tpu.core_type = #tpu.core_type<tc>, window_params = [{transform_indices = @transform_0, window_bounds = array<i64: 8, 192>}, {transform_indices = @transform_1, window_bounds = array<i64: 192, 32>}, {transform_indices = @transform_2, window_bounds = array<i64: 8, 32>}]} {
    %c0 = arith.constant 0 : index
    %c0_0 = arith.constant 0 : index
    %0 = vector.load %arg2[%c0, %c0_0] : memref<8x192xbf16, #tpu.memory_space<vmem>>, vector<8x192xbf16>
    %c0_1 = arith.constant 0 : index
    %c0_2 = arith.constant 0 : index
    %1 = vector.load %arg3[%c0_1, %c0_2] : memref<192x32xbf16, #tpu.memory_space<vmem>>, vector<192x32xbf16>
    %cst = arith.constant dense<0.000000e+00> : vector<8x32xf32>
    %2 = tpu.matmul %0, %1, %cst {dimension_numbers = #tpu.dot_dimension_numbers<[1], [0], [0], [1], [0, 0, 1, 1], [], []>} : vector<8x192xbf16>, vector<192x32xbf16>, vector<8x32xf32> -> vector<8x32xf32>
    %3 = arith.truncf %2 : vector<8x32xf32> to vector<8x32xbf16>
    %c0_3 = arith.constant 0 : index
    %c0_4 = arith.constant 0 : index
    %4 = vector.load %arg4[%c0_3, %c0_4] : memref<8x32xbf16, #tpu.memory_space<vmem>>, vector<8x32xbf16>
    tpu.vector_store %arg4[%c0_3, %c0_4], %3 {strides = array<i32>} : memref<8x32xbf16, #tpu.memory_space<vmem>>, vector<8x32xbf16>,
    return
  }
  func.func @transform_0(%arg0: i32, %arg1: i32) -> (i32, i32) {
    %c0_i32 = arith.constant 0 : i32
    %c0_i32_0 = arith.constant 0 : i32
    return %arg0, %c0_i32 : i32, i32
  }
  func.func @transform_1(%arg0: i32, %arg1: i32) -> (i32, i32) {
    %c0_i32 = arith.constant 0 : i32
    %c0_i32_0 = arith.constant 0 : i32
    return %c0_i32, %arg1 : i32, i32
  }
  func.func @transform_2(%arg0: i32, %arg1: i32) -> (i32, i32) {
    %c0_i32 = arith.constant 0 : i32
    return %arg0, %arg1 : i32, i32
  }
}

</mosaic_0001>

<llo_original>
// kernel: tpu_custom_call.1
$region0: #{tpu_custom_call.1}
  #allocation0 [shape = 'u32[]', space=smem, size = 0x4, offset = 0x4, fixed_abs, tag = 'smem constant byte address 0x4 - core index']
  #allocation1 [shape = 'u32[144,128]{1,0:T(1,128)}', space=vmem, size = 0x12000, scoped, tag = 'internal scratch']
  %s0 = inlined_call_operand.vmem [shape: bf16[8,192], index: 0, kind: input, shape index: {}]
  %s1 = inlined_call_operand.vmem [shape: bf16[192,32], index: 1, kind: input, shape index: {}]
  %s2 = inlined_call_operand.hbm [shape: bf16[8,32], index: 2, kind: output, shape index: {}]
  %s3 = sld [smem:[#allocation0]]
  $region18: #{tpu_custom_call.1} parent=0
    _
  %s5 = ssub.s32 1, %s3
  %s6 = scalar_select 0, %s5, %s3
  $region1: #{tpu_custom_call.1} parent=0
    #allocation2 [shape = 'u8[2048]{0}', space=vmem, size = 0x800, scoped, tag = 'output window, operand 0, single buffered']
    #allocation3 [shape = 's32[1]{0}', space=sflag, size = 0x4, scoped, tag = 'scoped memory for tpu_custom_call.1']
    %7 = vsyncpa [#allocation3], 0
    // Predicated region
    $region2: #{tpu_custom_call.1} parent=1 // pred_check
      _
    $region3: #{tpu_custom_call.1} parent=1 // pred_check_branch
      %9 = sbr.rel (0) target = $region5
    $region4: #{tpu_custom_call.1} parent=1 // pred_region
      _
    $region5: #{tpu_custom_call.1} parent=1 // pred_fallthru
      _
    // Predicated region
    $region6: #{tpu_custom_call.1} parent=1 // pred_check
      _
    $region7: #{tpu_custom_call.1} parent=1 // pred_check_branch
      %11 = sbr.rel (0) target = $region9
    $region8: #{tpu_custom_call.1} parent=1 // pred_region
      _
    $region9: #{tpu_custom_call.1} parent=1 // pred_fallthru
      _
    %v13 = vld [vmem:[%s0] sm:$0xff]
    %v14 = vld [vmem:[%s1] sm:$0xf]
    %v15 = vld [vmem:[%s1 + $0x4] sm:$0xf]
    %v16 = vld [vmem:[%s1 + $0x8] sm:$0xf]
    %v17 = vld [vmem:[%s1 + $0xc] sm:$0xf]
    %v18 = vld [vmem:[%s1 + $0x10] sm:$0xf]
    %v19 = vld [vmem:[%s1 + $0x14] sm:$0xf]
    %v20 = vld [vmem:[%s1 + $0x18] sm:$0xf]
    %v21 = vld [vmem:[%s1 + $0x1c] sm:$0xf]
    %v22 = vld [vmem:[%s1 + $0x20] sm:$0xf]
    %v23 = vld [vmem:[%s1 + $0x24] sm:$0xf]
    %v24 = vld [vmem:[%s1 + $0x28] sm:$0xf]
    %v25 = vld [vmem:[%s1 + $0x2c] sm:$0xf]
    %v26 = vld [vmem:[%s1 + $0x30] sm:$0xf]
    %v27 = vld [vmem:[%s1 + $0x34] sm:$0xf]
    %v28 = vld [vmem:[%s1 + $0x38] sm:$0xf]
    %v29 = vld [vmem:[%s1 + $0x3c] sm:$0xf]
    %v30 = vld [vmem:[%s1 + $0x40] sm:$0xf]
    %v31 = vld [vmem:[%s1 + $0x44] sm:$0xf]
    %v32 = vld [vmem:[%s1 + $0x48] sm:$0xf]
    %v33 = vld [vmem:[%s1 + $0x4c] sm:$0xf]
    %v34 = vld [vmem:[%s1 + $0x50] sm:$0xf]
    %v35 = vld [vmem:[%s1 + $0x54] sm:$0xf]
    %v36 = vld [vmem:[%s1 + $0x58] sm:$0xf]
    %v37 = vld [vmem:[%s1 + $0x5c] sm:$0xf]
    %v39 = vunpack.c.l.b16 %v13
    %v40 = vunpack.c.h.b16 %v13
    %v41 = vpack.c.b16 %v39, %v39
    %v42 = vpack.c.b16 %v40, %v40
    %v68 = vunpack.c.l.b16 %v14
    %v69 = vunpack.c.l.b16 %v15
    %v70 = vunpack.c.l.b16 %v16
    %v71 = vunpack.c.l.b16 %v17
    %v72 = vunpack.c.l.b16 %v18
    %v73 = vunpack.c.l.b16 %v19
    %v74 = vunpack.c.l.b16 %v20
    %v75 = vunpack.c.l.b16 %v21
    %v76 = vunpack.c.l.b16 %v22
    %v77 = vunpack.c.l.b16 %v23
    %v78 = vunpack.c.l.b16 %v24
    %v79 = vunpack.c.l.b16 %v25
    %v80 = vunpack.c.l.b16 %v26
    %v81 = vunpack.c.l.b16 %v27
    %v82 = vunpack.c.l.b16 %v28
    %v83 = vunpack.c.l.b16 %v29
    %v84 = vunpack.c.l.b16 %v30
    %v85 = vunpack.c.l.b16 %v31
    %v86 = vunpack.c.l.b16 %v32
    %v87 = vunpack.c.l.b16 %v33
    %v88 = vunpack.c.l.b16 %v34
    %v89 = vunpack.c.l.b16 %v35
    %v90 = vunpack.c.l.b16 %v36
    %v91 = vunpack.c.l.b16 %v37
    %v92 = vpack.c.b16 %v69, %v68
    %v93 = vpack.c.b16 %v71, %v70
    %v94 = vpack.c.b16 %v73, %v72
    %v95 = vpack.c.b16 %v75, %v74
    %v96 = vpack.c.b16 %v77, %v76
    %v97 = vpack.c.b16 %v79, %v78
    %v98 = vpack.c.b16 %v81, %v80
    %v99 = vpack.c.b16 %v83, %v82
    %v100 = vpack.c.b16 %v85, %v84
    %v101 = vpack.c.b16 %v87, %v86
    %v102 = vpack.c.b16 %v89, %v88
    %v103 = vpack.c.b16 %v91, %v90
    %vm116 = vcmask 523264
    %v118 = vsel %vm116, %v42, 0
    %120 = vmatprep.subr.bf16.mxu0 0
    %121 = vmatpush1.bf16.msra.mxu0 %v99
    %122 = vmatprep.subr.bf16.mxu0 0
    %123 = vmatpush1.bf16.msra.mxu0 %v98
    %124 = vmatprep.subr.bf16.mxu0 0
    %125 = vmatpush1.bf16.msra.mxu0 %v97
    %126 = vmatprep.subr.bf16.mxu0 0
    %127 = vmatpush1.bf16.msra.mxu0 %v96
    %128 = vmatprep.subr.bf16.mxu0 0
    %129 = vmatpush1.bf16.msra.mxu0 %v95
    %130 = vmatprep.subr.bf16.mxu0 0
    %131 = vmatpush1.bf16.msra.mxu0 %v94
    %132 = vmatprep.subr.bf16.mxu0 0
    %133 = vmatpush1.bf16.msra.mxu0 %v93
    %134 = vmatprep.subr.bf16.mxu0 0
    %135 = vmatpush1.bf16.msra.mxu0 %v92
    %136 = vmatprep.subr.bf16.mxu0 0
    %137 = vmatpush2.bf16.msra.mxu0 0
    %138 = vmatprep.subr.bf16.mxu0 0
    %139 = vmatpush2.bf16.msra.mxu0 0
    %140 = vmatprep.subr.bf16.mxu0 0
    %141 = vmatpush2.bf16.msra.mxu0 0
    %142 = vmatprep.subr.bf16.mxu0 0
    %143 = vmatpush2.bf16.msra.mxu0 0
    %144 = vmatprep.subr.bf16.mxu0 0
    %145 = vmatpush2.bf16.msra.mxu0 %v103
    %146 = vmatprep.subr.bf16.mxu0 0
    %147 = vmatpush2.bf16.msra.mxu0 %v102
    %148 = vmatprep.subr.bf16.mxu0 0
    %149 = vmatpush2.bf16.msra.mxu0 %v101
    %150 = vmatprep.subr.bf16.mxu0 0
    %151 = vmatpush2.bf16.msra.mxu0 %v100
    %152 = vmatprep.mubr.bf16.mxu0 %v118
    %153 = vmatmul.mubr.bf16.gmra.mxu0 %v41
    %v154 = vpop.f32.mrf.mxu0
    %v155 = vadd.f32 0.0, %v154
    %v156 = vpop.f32.mrf.mxu0
    %v157 = vpop.f32.mrf.mxu0
    %v158 = vpop.f32.mrf.mxu0
    %159 = vdwg.mxu0
    %v160 = vpack.c.bf16 %v155, %v155
    %vm161 = vcmask 257024
    %162 = vst.msk [vmem:[#allocation2] sm:$0xf] %vm161, %v160
    // Predicated region
    $region10: #{tpu_custom_call.1} parent=1 // pred_check
      _
    $region11: #{tpu_custom_call.1} parent=1 // pred_check_branch
      %164 = sbr.rel (0) target = $region13
    $region12: #{tpu_custom_call.1} parent=1 // pred_region
      %s166 = ssub.s32 64, 64
      %167 = vsyncadd [#allocation3], %s166
      %s169 = sshll.u32 [#allocation2], 4
      %s170 = int_to_ptr.vmem [resolvable:$true] %s169
      %172 = dma.vmem_to_hbm [thread:$0]  %s170, 64, %s2, [#allocation3]
    $region13: #{tpu_custom_call.1} parent=1 // pred_fallthru
      _
    // Predicated region
    $region14: #{tpu_custom_call.1} parent=1 // pred_check
      _
    $region15: #{tpu_custom_call.1} parent=1 // pred_check_branch
      %174 = sbr.rel (0) target = $region17
    $region16: #{tpu_custom_call.1} parent=1 // pred_region
      %175 = dma.done [#allocation3], 64
    $region17: #{tpu_custom_call.1} parent=1 // pred_fallthru
      _
    %176 = vsyncpa [#allocation3], 1

</llo_original>
